<compile_context>
chip_gen: v7x
topology: tpu7x:2x2x1
jax: 0.10.0
libtpu: 0.0.40
codegen_flags: <defaults>
</compile_context>

<pallas_src>
import jax
import jax.numpy as jnp
from jax.experimental import pallas as pl
from jax.experimental.pallas import tpu as pltpu


def mlp_kernel(x_ref, w1_ref, b1_ref, w2_ref, b2_ref, o_ref):
    # fc1 on the MXU with f32 accumulation; bias + ReLU in f32 on the VPU
    # (biases stay f32 so v5e -- which has no bf16 VPU -- keeps a fast path).
    h = jnp.dot(x_ref[...].astype(w1_ref.dtype), w1_ref[...],
                preferred_element_type=jnp.float32)
    h = jnp.maximum(h + b1_ref[...].astype(jnp.float32), 0.0)
    # fc2: cast the activation to the weight dtype (no-op for f32 weights).
    y = jnp.dot(h.astype(w2_ref.dtype), w2_ref[...],
                preferred_element_type=jnp.float32)
    o_ref[...] = (y + b2_ref[...].astype(jnp.float32)).astype(o_ref.dtype)


def _compiler_params(footprint_bytes, semantics=None):
    # Explicit scoped-VMEM limit: never below v5e's 16 MiB default, never above a
    # conservative 48 MiB (safe under v7x's 64 MiB physical / 32 MiB default).
    limit = int(min(max(2 * footprint_bytes, 16 * 1024 * 1024), 48 * 1024 * 1024))
    kwargs = dict(vmem_limit_bytes=limit)
    if semantics is not None:
        kwargs["dimension_semantics"] = semantics
    return pltpu.CompilerParams(**kwargs)


def mlp_forward(x, w1, b1, w2, b2, *, gridless_rows=4096, block_b=1024,
                out_dtype=jnp.float32):
    """y = relu(x @ w1 + b1) @ w2 + b2  (weights stored [in, out])."""
    B, K = x.shape
    H = w1.shape[1]
    O = w2.shape[1]

    def nbytes(a):
        return a.size * a.dtype.itemsize

    out_itemsize = jnp.dtype(out_dtype).itemsize
    weight_bytes = nbytes(w1) + nbytes(b1) + nbytes(w2) + nbytes(b2)
    cost = pl.CostEstimate(
        flops=2 * B * (K * H + H * O),
        transcendentals=0,
        bytes_accessed=nbytes(x) + weight_bytes + B * O * out_itemsize,
    )

    if B <= gridless_rows:
        # Whole problem resident in VMEM: no grid, no software-pipeline overhead.
        footprint = nbytes(x) + weight_bytes + B * O * out_itemsize
        return pl.pallas_call(
            mlp_kernel,
            out_shape=jax.ShapeDtypeStruct((B, O), out_dtype),
            in_specs=[pl.BlockSpec(memory_space=pltpu.MemorySpace.VMEM)] * 5,
            out_specs=pl.BlockSpec(memory_space=pltpu.MemorySpace.VMEM),
            compiler_params=_compiler_params(footprint),
            cost_estimate=cost,
        )(x, w1, b1, w2, b2)

    # Very large batch: tile the batch axis with big blocks (>=1024 rows
    # amortizes the ~0.35us per-step pipeline overhead), keep weights resident
    # across steps, and shard the batch axis across v7x's two TensorCores.
    grid = pl.cdiv(B, block_b)
    B_pad = grid * block_b
    if B_pad != B:
        x = jnp.pad(x, ((0, B_pad - B), (0, 0)))

    # Resident weights + double-buffered per-step x/y traffic.
    footprint = weight_bytes + 2 * block_b * (K * x.dtype.itemsize + O * out_itemsize)

    y = pl.pallas_call(
        mlp_kernel,
        out_shape=jax.ShapeDtypeStruct((B_pad, O), out_dtype),
        grid_spec=pltpu.PrefetchScalarGridSpec(
            num_scalar_prefetch=0,
            grid=(grid,),
            in_specs=[
                pl.BlockSpec((block_b, K), lambda i: (i, 0)),
                pl.BlockSpec((K, H), lambda i: (0, 0)),
                pl.BlockSpec((1, H), lambda i: (0, 0)),
                pl.BlockSpec((H, O), lambda i: (0, 0)),
                pl.BlockSpec((1, O), lambda i: (0, 0)),
            ],
            # Unpadded last dim (O=16 == full array dim) is a legal block shape;
            # it keeps HBM write traffic at 1x (vs 8x for 128-lane padding) and
            # removes the external slice pass.
            out_specs=pl.BlockSpec((block_b, O), lambda i: (i, 0)),
        ),
        compiler_params=_compiler_params(footprint, semantics=("parallel",)),
        cost_estimate=cost,
    )(x, w1, b1, w2, b2)
    return y[:B] if B_pad != B else y


if __name__ == "__main__":
    # Module hyperparameters (consistent with the nn.Linear shapes)
    input_size, hidden_size, output_size = 32, 64, 16

    key = jax.random.PRNGKey(0)
    kx, kw1, kb1, kw2, kb2, kx_big, kx_bf = jax.random.split(key, 7)

    # Parameters stored as [in, out] (transposed vs nn.Linear.weight) so the
    # kernel computes x @ W directly. Done once, outside the forward call.
    w1 = jax.random.normal(kw1, (input_size, hidden_size), dtype=jnp.float32) * 0.1
    b1 = jax.random.normal(kb1, (1, hidden_size), dtype=jnp.float32) * 0.1
    w2 = jax.random.normal(kw2, (hidden_size, output_size), dtype=jnp.float32) * 0.1
    b2 = jax.random.normal(kb2, (1, output_size), dtype=jnp.float32) * 0.1

    def ref(xx):
        return jnp.maximum(xx @ w1 + b1, 0.0) @ w2 + b2

    # 1) Small batch -> gridless fast path (f32, exact vs reference).
    x = jax.random.normal(kx, (8, input_size), dtype=jnp.float32)
    y = jax.block_until_ready(mlp_forward(x, w1, b1, w2, b2))
    assert y.shape == (8, output_size)
    assert jnp.allclose(y, ref(x), atol=1e-5, rtol=1e-5), "mismatch (gridless path)"

    # 2) Force the batch-tiled path; non-multiple batch exercises cdiv + padding.
    x_big = jax.random.normal(kx_big, (1300, input_size), dtype=jnp.float32)
    y_big = jax.block_until_ready(
        mlp_forward(x_big, w1, b1, w2, b2, gridless_rows=0, block_b=512))
    assert y_big.shape == (1300, output_size)
    assert jnp.allclose(y_big, ref(x_big), atol=1e-5, rtol=1e-5), "mismatch (tiled path)"

    # 3) bf16 storage / f32 accumulation (the memory-bound win at large batch).
    w1_bf = w1.astype(jnp.bfloat16)
    w2_bf = w2.astype(jnp.bfloat16)
    x_bf = jax.random.normal(kx_bf, (256, input_size), jnp.float32).astype(jnp.bfloat16)
    y_bf = jax.block_until_ready(mlp_forward(x_bf, w1_bf, b1, w2_bf, b2))
    assert y_bf.shape == (256, output_size)
    ref_bf = (jnp.maximum(x_bf.astype(jnp.float32) @ w1_bf.astype(jnp.float32) + b1, 0.0)
              @ w2_bf.astype(jnp.float32) + b2)
    assert jnp.allclose(y_bf, ref_bf, atol=5e-2, rtol=5e-2), "mismatch (bf16 path)"

    # TODO(synk): on v7x, fp8 weight storage is a further (tiny) win if accuracy allows.
    print("KERNEL_OK")
</pallas_src>

<mosaic_0001>
module attributes {stable_mosaic.version = 11 : i64} {
  func.func @mlp_kernel(%arg0: memref<8x32xf32, #tpu.memory_space<vmem>>, %arg1: memref<32x64xf32, #tpu.memory_space<vmem>>, %arg2: memref<1x64xf32, #tpu.memory_space<vmem>>, %arg3: memref<64x16xf32, #tpu.memory_space<vmem>>, %arg4: memref<1x16xf32, #tpu.memory_space<vmem>>, %arg5: memref<8x16xf32, #tpu.memory_space<vmem>>) attributes {dimension_semantics = [], scalar_prefetch = 0 : i64, scratch_operands = 0 : i64, tpu.core_type = #tpu.core_type<tc>} {
    %c0 = arith.constant 0 : index
    %c0_0 = arith.constant 0 : index
    %0 = vector.load %arg0[%c0, %c0_0] : memref<8x32xf32, #tpu.memory_space<vmem>>, vector<8x32xf32>
    %c0_1 = arith.constant 0 : index
    %c0_2 = arith.constant 0 : index
    %1 = vector.load %arg1[%c0_1, %c0_2] : memref<32x64xf32, #tpu.memory_space<vmem>>, vector<32x64xf32>
    %cst = arith.constant dense<0.000000e+00> : vector<8x64xf32>
    %2 = tpu.matmul %0, %1, %cst {dimension_numbers = #tpu.dot_dimension_numbers<[1], [0], [0], [1], [0, 0, 1, 1], [], []>} : vector<8x32xf32>, vector<32x64xf32>, vector<8x64xf32> -> vector<8x64xf32>
    %c0_3 = arith.constant 0 : index
    %c0_4 = arith.constant 0 : index
    %3 = vector.load %arg2[%c0_3, %c0_4] : memref<1x64xf32, #tpu.memory_space<vmem>>, vector<1x64xf32>
    %4 = vector.broadcast %3 : vector<1x64xf32> to vector<8x64xf32>
    %5 = arith.addf %2, %4 : vector<8x64xf32>
    %cst_5 = arith.constant 0.000000e+00 : f32
    %6 = vector.broadcast %cst_5 : f32 to vector<8x64xf32>
    %7 = arith.maximumf %5, %6 : vector<8x64xf32>
    %c0_6 = arith.constant 0 : index
    %c0_7 = arith.constant 0 : index
    %8 = vector.load %arg3[%c0_6, %c0_7] : memref<64x16xf32, #tpu.memory_space<vmem>>, vector<64x16xf32>
    %cst_8 = arith.constant dense<0.000000e+00> : vector<8x16xf32>
    %9 = tpu.matmul %7, %8, %cst_8 {dimension_numbers = #tpu.dot_dimension_numbers<[1], [0], [0], [1], [0, 0, 1, 1], [], []>} : vector<8x64xf32>, vector<64x16xf32>, vector<8x16xf32> -> vector<8x16xf32>
    %c0_9 = arith.constant 0 : index
    %c0_10 = arith.constant 0 : index
    %10 = vector.load %arg4[%c0_9, %c0_10] : memref<1x16xf32, #tpu.memory_space<vmem>>, vector<1x16xf32>
    %11 = vector.broadcast %10 : vector<1x16xf32> to vector<8x16xf32>
    %12 = arith.addf %9, %11 : vector<8x16xf32>
    %c0_11 = arith.constant 0 : index
    %c0_12 = arith.constant 0 : index
    %13 = vector.load %arg5[%c0_11, %c0_12] : memref<8x16xf32, #tpu.memory_space<vmem>>, vector<8x16xf32>
    tpu.vector_store %arg5[%c0_11, %c0_12], %12 {strides = array<i32>} : memref<8x16xf32, #tpu.memory_space<vmem>>, vector<8x16xf32>,
    return
  }
}

</mosaic_0001>

<llo_original>
// kernel: tpu_custom_call.1
$region0: #{tpu_custom_call.1}
  #allocation0 [shape = 'u32[]', space=smem, size = 0x4, offset = 0x4, fixed_abs, tag = 'smem constant byte address 0x4 - core index']
  #allocation1 [shape = 'u32[144,128]{1,0:T(1,128)}', space=vmem, size = 0x12000, scoped, tag = 'internal scratch']
  %s0 = inlined_call_operand.vmem [shape: f32[8,32], index: 0, kind: input, shape index: {}]
  %s1 = inlined_call_operand.vmem [shape: f32[32,64], index: 1, kind: input, shape index: {}]
  %s2 = inlined_call_operand.vmem [shape: f32[1,64], index: 2, kind: input, shape index: {}]
  %s3 = inlined_call_operand.vmem [shape: f32[64,16], index: 3, kind: input, shape index: {}]
  %s4 = inlined_call_operand.vmem [shape: f32[1,16], index: 4, kind: input, shape index: {}]
  %s5 = inlined_call_operand.hbm [shape: f32[8,16], index: 5, kind: output, shape index: {}]
  %s6 = sld [smem:[#allocation0]]
  $region30: #{tpu_custom_call.1} parent=0
    _
  %s8 = ssub.s32 1, %s6
  %s9 = scalar_select 0, %s8, %s6
  $region1: #{tpu_custom_call.1} parent=0
    #allocation2 [shape = 'u8[4096]{0}', space=vmem, size = 0x1000, scoped, tag = 'output window, operand 0, single buffered']
    #allocation3 [shape = 's32[1]{0}', space=sflag, size = 0x4, scoped, tag = 'scoped memory for tpu_custom_call.1']
    %10 = vsyncpa [#allocation3], 0
    // Predicated region
    $region2: #{tpu_custom_call.1} parent=1 // pred_check
      _
    $region3: #{tpu_custom_call.1} parent=1 // pred_check_branch
      %12 = sbr.rel (0) target = $region5
    $region4: #{tpu_custom_call.1} parent=1 // pred_region
      _
    $region5: #{tpu_custom_call.1} parent=1 // pred_fallthru
      _
    // Predicated region
    $region6: #{tpu_custom_call.1} parent=1 // pred_check
      _
    $region7: #{tpu_custom_call.1} parent=1 // pred_check_branch
      %14 = sbr.rel (0) target = $region9
    $region8: #{tpu_custom_call.1} parent=1 // pred_region
      _
    $region9: #{tpu_custom_call.1} parent=1 // pred_fallthru
      _
    // Predicated region
    $region10: #{tpu_custom_call.1} parent=1 // pred_check
      _
    $region11: #{tpu_custom_call.1} parent=1 // pred_check_branch
      %16 = sbr.rel (0) target = $region13
    $region12: #{tpu_custom_call.1} parent=1 // pred_region
      _
    $region13: #{tpu_custom_call.1} parent=1 // pred_fallthru
      _
    // Predicated region
    $region14: #{tpu_custom_call.1} parent=1 // pred_check
      _
    $region15: #{tpu_custom_call.1} parent=1 // pred_check_branch
      %18 = sbr.rel (0) target = $region17
    $region16: #{tpu_custom_call.1} parent=1 // pred_region
      _
    $region17: #{tpu_custom_call.1} parent=1 // pred_fallthru
      _
    // Predicated region
    $region18: #{tpu_custom_call.1} parent=1 // pred_check
      _
    $region19: #{tpu_custom_call.1} parent=1 // pred_check_branch
      %20 = sbr.rel (0) target = $region21
    $region20: #{tpu_custom_call.1} parent=1 // pred_region
      _
    $region21: #{tpu_custom_call.1} parent=1 // pred_fallthru
      _
    %v21 = vld [vmem:[%s0] sm:$0xff]
    %v22 = vld [vmem:[%s1] sm:$0xff]
    %v23 = vld [vmem:[%s1 + $0x8] sm:$0xff]
    %v24 = vld [vmem:[%s1 + $0x10] sm:$0xff]
    %v25 = vld [vmem:[%s1 + $0x18] sm:$0xff]
    %v26 = vld [vmem:[%s2] sm:$0x1]
    %v28 = vlaneseq
    %v29 = vshrl.u32 %v28, 7
    %v30 = vsub.s32 0, %v29
    %v31 = vrot.slane %v26, %v30
    %vm33 = vcmask 261120
    %v35 = vsel %vm33, %v21, 0
    %37 = vmatprep.subr.mxu0 0.0
    %38 = vmatpush1.msra.mxu0 %v22
    %39 = vmatprep.subr.mxu0 0.0
    %40 = vmatpush1.msra.mxu0 %v23
    %41 = vmatprep.subr.mxu0 0.0
    %42 = vmatpush1.msra.mxu0 %v24
    %43 = vmatprep.subr.mxu0 0.0
    %44 = vmatpush1.msra.mxu0 %v25
    %45 = vmatprep.subr.mxu0 0.0
    %46 = vmatpush1.msra.mxu0 0.0
    %47 = vmatprep.subr.mxu0 0.0
    %48 = vmatpush1.msra.mxu0 0.0
    %49 = vmatprep.subr.mxu0 0.0
    %50 = vmatpush1.msra.mxu0 0.0
    %51 = vmatprep.subr.mxu0 0.0
    %52 = vmatpush1.msra.mxu0 0.0
    %53 = vmatprep.subr.mxu0 0.0
    %54 = vmatpush1.msra.mxu0 0.0
    %55 = vmatprep.subr.mxu0 0.0
    %56 = vmatpush1.msra.mxu0 0.0
    %57 = vmatprep.subr.mxu0 0.0
    %58 = vmatpush1.msra.mxu0 0.0
    %59 = vmatprep.subr.mxu0 0.0
    %60 = vmatpush1.msra.mxu0 0.0
    %61 = vmatprep.subr.mxu0 0.0
    %62 = vmatpush1.msra.mxu0 0.0
    %63 = vmatprep.subr.mxu0 0.0
    %64 = vmatpush1.msra.mxu0 0.0
    %65 = vmatprep.subr.mxu0 0.0
    %66 = vmatpush1.msra.mxu0 0.0
    %67 = vmatprep.subr.mxu0 0.0
    %68 = vmatpush1.msra.mxu0 0.0
    %69 = vmatprep.subr.mxu0 0.0
    %70 = vmatpush1.msra.mxu0 0.0
    %71 = vmatprep.subr.mxu0 0.0
    %72 = vmatpush1.msra.mxu0 0.0
    %73 = vmatprep.subr.mxu0 0.0
    %74 = vmatpush1.msra.mxu0 0.0
    %75 = vmatprep.subr.mxu0 0.0
    %76 = vmatpush1.msra.mxu0 0.0
    %77 = vmatprep.subr.mxu0 0.0
    %78 = vmatpush1.msra.mxu0 0.0
    %79 = vmatprep.subr.mxu0 0.0
    %80 = vmatpush1.msra.mxu0 0.0
    %81 = vmatprep.subr.mxu0 0.0
    %82 = vmatpush1.msra.mxu0 0.0
    %83 = vmatprep.subr.mxu0 0.0
    %84 = vmatpush1.msra.mxu0 0.0
    %85 = vmatprep.subr.mxu0 0.0
    %86 = vmatpush1.msra.mxu0 0.0
    %87 = vmatprep.subr.mxu0 0.0
    %88 = vmatpush1.msra.mxu0 0.0
    %89 = vmatprep.subr.mxu0 0.0
    %90 = vmatpush1.msra.mxu0 0.0
    %91 = vmatprep.subr.mxu0 0.0
    %92 = vmatpush1.msra.mxu0 0.0
    %93 = vmatprep.subr.mxu0 0.0
    %94 = vmatpush1.msra.mxu0 0.0
    %95 = vmatprep.subr.mxu0 0.0
    %96 = vmatpush1.msra.mxu0 0.0
    %97 = vmatprep.subr.mxu0 0.0
    %98 = vmatpush1.msra.mxu0 0.0
    %99 = vmatprep.subr.mxu0 0.0
    %100 = vmatpush1.msra.mxu0 0.0
    %101 = vmatprep.mubr.f32.mxu0 0.0
    %102 = vmatmul.mubr.f32.gmra.mrb[0].mxu0 %v35
    %v103 = vpop.f32.mrb[0].mxu0
    %v104 = vadd.f32 %v31, %v103
    %v105 = vpop.f32.mrb[0].mxu0
    %106 = vdwg.mxu0
    %v107 = vmax.f32 %v104, 0.0
    %v108 = vld [vmem:[%s3] sm:$0xff]
    %v109 = vld [vmem:[%s3 + $0x8] sm:$0xff]
    %v110 = vld [vmem:[%s3 + $0x10] sm:$0xff]
    %v111 = vld [vmem:[%s3 + $0x18] sm:$0xff]
    %v112 = vld [vmem:[%s3 + $0x20] sm:$0xff]
    %v113 = vld [vmem:[%s3 + $0x28] sm:$0xff]
    %v114 = vld [vmem:[%s3 + $0x30] sm:$0xff]
    %v115 = vld [vmem:[%s3 + $0x38] sm:$0xff]
    %v116 = vld [vmem:[%s4] sm:$0x1]
    %v118 = vlaneseq
    %v119 = vshrl.u32 %v118, 7
    %v120 = vsub.s32 0, %v119
    %v121 = vrot.slane %v116, %v120
    %vm123 = vcmask 523264
    %v125 = vsel %vm123, %v107, 0
    %127 = vmatprep.subr.mxu0 0.0
    %128 = vmatpush1.msra.mxu0 %v108
    %129 = vmatprep.subr.mxu0 0.0
    %130 = vmatpush1.msra.mxu0 %v109
    %131 = vmatprep.subr.mxu0 0.0
    %132 = vmatpush1.msra.mxu0 %v110
    %133 = vmatprep.subr.mxu0 0.0
    %134 = vmatpush1.msra.mxu0 %v111
    %135 = vmatprep.subr.mxu0 0.0
    %136 = vmatpush1.msra.mxu0 %v112
    %137 = vmatprep.subr.mxu0 0.0
    %138 = vmatpush1.msra.mxu0 %v113
    %139 = vmatprep.subr.mxu0 0.0
    %140 = vmatpush1.msra.mxu0 %v114
    %141 = vmatprep.subr.mxu0 0.0
    %142 = vmatpush1.msra.mxu0 %v115
    %143 = vmatprep.subr.mxu0 0.0
    %144 = vmatpush1.msra.mxu0 0.0
    %145 = vmatprep.subr.mxu0 0.0
    %146 = vmatpush1.msra.mxu0 0.0
    %147 = vmatprep.subr.mxu0 0.0
    %148 = vmatpush1.msra.mxu0 0.0
    %149 = vmatprep.subr.mxu0 0.0
    %150 = vmatpush1.msra.mxu0 0.0
    %151 = vmatprep.subr.mxu0 0.0
    %152 = vmatpush1.msra.mxu0 0.0
    %153 = vmatprep.subr.mxu0 0.0
    %154 = vmatpush1.msra.mxu0 0.0
    %155 = vmatprep.subr.mxu0 0.0
    %156 = vmatpush1.msra.mxu0 0.0
    %157 = vmatprep.subr.mxu0 0.0
    %158 = vmatpush1.msra.mxu0 0.0
    %159 = vmatprep.subr.mxu0 0.0
    %160 = vmatpush1.msra.mxu0 0.0
    %161 = vmatprep.subr.mxu0 0.0
    %162 = vmatpush1.msra.mxu0 0.0
    %163 = vmatprep.subr.mxu0 0.0
    %164 = vmatpush1.msra.mxu0 0.0
    %165 = vmatprep.subr.mxu0 0.0
    %166 = vmatpush1.msra.mxu0 0.0
    %167 = vmatprep.subr.mxu0 0.0
    %168 = vmatpush1.msra.mxu0 0.0
    %169 = vmatprep.subr.mxu0 0.0
    %170 = vmatpush1.msra.mxu0 0.0
    %171 = vmatprep.subr.mxu0 0.0
    %172 = vmatpush1.msra.mxu0 0.0
    %173 = vmatprep.subr.mxu0 0.0
    %174 = vmatpush1.msra.mxu0 0.0
    %175 = vmatprep.subr.mxu0 0.0
    %176 = vmatpush1.msra.mxu0 0.0
    %177 = vmatprep.subr.mxu0 0.0
    %178 = vmatpush1.msra.mxu0 0.0
    %179 = vmatprep.subr.mxu0 0.0
    %180 = vmatpush1.msra.mxu0 0.0
    %181 = vmatprep.subr.mxu0 0.0
    %182 = vmatpush1.msra.mxu0 0.0
    %183 = vmatprep.subr.mxu0 0.0
    %184 = vmatpush1.msra.mxu0 0.0
    %185 = vmatprep.subr.mxu0 0.0
    %186 = vmatpush1.msra.mxu0 0.0
    %187 = vmatprep.subr.mxu0 0.0
    %188 = vmatpush1.msra.mxu0 0.0
    %189 = vmatprep.subr.mxu0 0.0
    %190 = vmatpush1.msra.mxu0 0.0
    %191 = vmatprep.mubr.f32.mxu0 0.0
    %192 = vmatmul.mubr.f32.gmra.mrb[0].mxu0 %v125
    %v193 = vpop.f32.mrb[0].mxu0
    %v194 = vadd.f32 %v121, %v193
    %v195 = vpop.f32.mrb[0].mxu0
    %196 = vdwg.mxu0
    %vm197 = vcmask 130048
    %198 = vst.msk [vmem:[#allocation2] sm:$0xff] %vm197, %v194
    // Predicated region
    $region22: #{tpu_custom_call.1} parent=1 // pred_check
      _
    $region23: #{tpu_custom_call.1} parent=1 // pred_check_branch
      %200 = sbr.rel (0) target = $region25
    $region24: #{tpu_custom_call.1} parent=1 // pred_region
      %s202 = ssub.s32 128, 128
      %203 = vsyncadd [#allocation3], %s202
      %s205 = sshll.u32 [#allocation2], 4
      %s206 = int_to_ptr.vmem [resolvable:$true] %s205
      %208 = dma.vmem_to_hbm [thread:$0]  %s206, 128, %s5, [#allocation3]
    $region25: #{tpu_custom_call.1} parent=1 // pred_fallthru
      _
    // Predicated region
    $region26: #{tpu_custom_call.1} parent=1 // pred_check
      _
    $region27: #{tpu_custom_call.1} parent=1 // pred_check_branch
      %210 = sbr.rel (0) target = $region29
    $region28: #{tpu_custom_call.1} parent=1 // pred_region
      %211 = dma.done [#allocation3], 128
    $region29: #{tpu_custom_call.1} parent=1 // pred_fallthru
      _
    %212 = vsyncpa [#allocation3], 1

</llo_original>
